<compile_context>
chip_gen: v7x
topology: tpu7x:2x2x1
jax: 0.10.0
libtpu: 0.0.40
codegen_flags: <defaults>
</compile_context>

<pallas_src>
import jax
import jax.numpy as jnp
from jax.experimental import pallas as pl
from jax.experimental.pallas import tpu as pltpu  # noqa: F401  (TPU backend)


def _mlp_kernel(x_ref, w1_ref, b1_ref, w2_ref, b2_ref, o_ref):
    # Layer 1: (B, 1280) bf16 @ (1280, 64) bf16 -> f32 accumulate on the MXU.
    h = jnp.dot(x_ref[...], w1_ref[...], preferred_element_type=jnp.float32)
    h = h + b1_ref[...]                      # (1, 64) broadcasts over batch
    # Exact sigmoid: exp runs on the EUP; divide is cheap at this size.
    h = 1.0 / (1.0 + jnp.exp(-h))
    # Layer 2: (B, 64) bf16 @ (64, n_cls) bf16 -> f32 accumulate.
    out = jnp.dot(h.astype(jnp.bfloat16), w2_ref[...],
                  preferred_element_type=jnp.float32)
    out = out + b2_ref[...]                  # (1, n_cls)
    o_ref[...] = out.astype(o_ref.dtype)


def prepare_params(w1, b1, w2, b2):
    """One-time parameter prep (cast/reshape). Keep OUT of the per-call path.

    w1: (1280, 64), b1: (64,), w2: (64, num_classes), b2: (num_classes,)
    """
    return (
        w1.astype(jnp.bfloat16),                       # (1280, 64)
        b1.astype(jnp.float32).reshape(1, -1),         # (1, 64)
        w2.astype(jnp.bfloat16),                       # (64, n_cls)
        b2.astype(jnp.float32).reshape(1, -1),         # (1, n_cls)
    )


def target_classifier_forward(emb, params):
    """emb: any shape (B, ...) flattening to (B, 1280). Returns (B, n_cls) f32."""
    w1, b1, w2, b2 = params
    B = emb.shape[0]
    x = emb.reshape(B, -1).astype(jnp.bfloat16)        # (B, 1280)
    n_cls = w2.shape[1]

    return pl.pallas_call(
        _mlp_kernel,
        out_shape=jax.ShapeDtypeStruct((B, n_cls), jnp.float32),
    )(x, w1, b1, w2, b2)


def _init_linear(key, fan_in, fan_out, dtype=jnp.float32):
    """PyTorch nn.Linear default init: U(-1/sqrt(fan_in), 1/sqrt(fan_in))."""
    kw, kb = jax.random.split(key)
    bound = 1.0 / jnp.sqrt(fan_in)
    w = jax.random.uniform(kw, (fan_in, fan_out), dtype, -bound, bound)
    b = jax.random.uniform(kb, (fan_out,), dtype, -bound, bound)
    return w, b


if __name__ == "__main__":
    key = jax.random.PRNGKey(0)
    k_x, k_l1, k_l2 = jax.random.split(key, 3)

    B = 2
    NUM_CLASSES = 8          # configs.num_classes_target
    # emb flattens to (B, 1280); use a (B, 20, 64) embedding like SimMTM.
    emb = jax.random.normal(k_x, (B, 20, 64), jnp.float32)

    w1, b1 = _init_linear(k_l1, 1280, 64)
    w2, b2 = _init_linear(k_l2, 64, NUM_CLASSES)

    params = prepare_params(w1, b1, w2, b2)            # one-time prep
    pred = target_classifier_forward(emb, params)
    pred = jax.block_until_ready(pred)

    # Pure-JAX reference with matching bf16 matmul inputs (the only intended
    # numeric delta vs. PyTorch fp32 is the bf16 cast of x/w1/h/w2).
    x = emb.reshape(B, -1)
    h_ref = jax.nn.sigmoid(
        jnp.dot(x.astype(jnp.bfloat16), w1.astype(jnp.bfloat16),
                preferred_element_type=jnp.float32) + b1)
    ref = jnp.dot(h_ref.astype(jnp.bfloat16), w2.astype(jnp.bfloat16),
                  preferred_element_type=jnp.float32) + b2

    assert pred.shape == (B, NUM_CLASSES)
    assert jnp.allclose(pred, ref, atol=1e-2, rtol=1e-2), (
        f"max abs diff {jnp.max(jnp.abs(pred - ref))}")

    print("KERNEL_OK")
</pallas_src>

<mosaic_0001>
module attributes {stable_mosaic.version = 11 : i64} {
  func.func @_mlp_kernel(%arg0: memref<2x1280xbf16, #tpu.memory_space<vmem>>, %arg1: memref<1280x64xbf16, #tpu.memory_space<vmem>>, %arg2: memref<1x64xf32, #tpu.memory_space<vmem>>, %arg3: memref<64x8xbf16, #tpu.memory_space<vmem>>, %arg4: memref<1x8xf32, #tpu.memory_space<vmem>>, %arg5: memref<2x8xf32, #tpu.memory_space<vmem>>) attributes {dimension_semantics = [], scalar_prefetch = 0 : i64, scratch_operands = 0 : i64, tpu.core_type = #tpu.core_type<tc>} {
    %c0 = arith.constant 0 : index
    %c0_0 = arith.constant 0 : index
    %0 = vector.load %arg0[%c0, %c0_0] : memref<2x1280xbf16, #tpu.memory_space<vmem>>, vector<2x1280xbf16>
    %c0_1 = arith.constant 0 : index
    %c0_2 = arith.constant 0 : index
    %1 = vector.load %arg1[%c0_1, %c0_2] : memref<1280x64xbf16, #tpu.memory_space<vmem>>, vector<1280x64xbf16>
    %cst = arith.constant dense<0.000000e+00> : vector<2x64xf32>
    %2 = tpu.matmul %0, %1, %cst {dimension_numbers = #tpu.dot_dimension_numbers<[1], [0], [0], [1], [0, 0, 1, 1], [], []>} : vector<2x1280xbf16>, vector<1280x64xbf16>, vector<2x64xf32> -> vector<2x64xf32>
    %c0_3 = arith.constant 0 : index
    %c0_4 = arith.constant 0 : index
    %3 = vector.load %arg2[%c0_3, %c0_4] : memref<1x64xf32, #tpu.memory_space<vmem>>, vector<1x64xf32>
    %4 = vector.broadcast %3 : vector<1x64xf32> to vector<2x64xf32>
    %5 = arith.addf %2, %4 : vector<2x64xf32>
    %cst_5 = arith.constant 0.000000e+00 : f32
    %6 = vector.broadcast %cst_5 : f32 to vector<2x64xf32>
    %7 = arith.subf %6, %5 : vector<2x64xf32>
    %8 = math.exp %7 : vector<2x64xf32>
    %cst_6 = arith.constant 1.000000e+00 : f32
    %9 = vector.broadcast %cst_6 : f32 to vector<2x64xf32>
    %10 = arith.addf %9, %8 : vector<2x64xf32>
    %cst_7 = arith.constant 1.000000e+00 : f32
    %11 = vector.broadcast %cst_7 : f32 to vector<2x64xf32>
    %12 = arith.divf %11, %10 : vector<2x64xf32>
    %13 = arith.truncf %12 : vector<2x64xf32> to vector<2x64xbf16>
    %c0_8 = arith.constant 0 : index
    %c0_9 = arith.constant 0 : index
    %14 = vector.load %arg3[%c0_8, %c0_9] : memref<64x8xbf16, #tpu.memory_space<vmem>>, vector<64x8xbf16>
    %cst_10 = arith.constant dense<0.000000e+00> : vector<2x8xf32>
    %15 = tpu.matmul %13, %14, %cst_10 {dimension_numbers = #tpu.dot_dimension_numbers<[1], [0], [0], [1], [0, 0, 1, 1], [], []>} : vector<2x64xbf16>, vector<64x8xbf16>, vector<2x8xf32> -> vector<2x8xf32>
    %c0_11 = arith.constant 0 : index
    %c0_12 = arith.constant 0 : index
    %16 = vector.load %arg4[%c0_11, %c0_12] : memref<1x8xf32, #tpu.memory_space<vmem>>, vector<1x8xf32>
    %17 = vector.broadcast %16 : vector<1x8xf32> to vector<2x8xf32>
    %18 = arith.addf %15, %17 : vector<2x8xf32>
    %c0_13 = arith.constant 0 : index
    %c0_14 = arith.constant 0 : index
    %19 = vector.load %arg5[%c0_13, %c0_14] : memref<2x8xf32, #tpu.memory_space<vmem>>, vector<2x8xf32>
    tpu.vector_store %arg5[%c0_13, %c0_14], %18 {strides = array<i32>} : memref<2x8xf32, #tpu.memory_space<vmem>>, vector<2x8xf32>,
    return
  }
}

</mosaic_0001>

<llo_original>
// kernel: tpu_custom_call.1
$region0: #{tpu_custom_call.1}
  #allocation0 [shape = 'u32[]', space=smem, size = 0x4, offset = 0x4, fixed_abs, tag = 'smem constant byte address 0x4 - core index']
  #allocation1 [shape = 'u32[144,128]{1,0:T(1,128)}', space=vmem, size = 0x12000, scoped, tag = 'internal scratch']
  %s0 = inlined_call_operand.vmem [shape: bf16[2,1280], index: 0, kind: input, shape index: {}]
  %s1 = inlined_call_operand.vmem [shape: bf16[1280,64], index: 1, kind: input, shape index: {}]
  %s2 = inlined_call_operand.vmem [shape: f32[1,64], index: 2, kind: input, shape index: {}]
  %s3 = inlined_call_operand.vmem [shape: bf16[64,8], index: 3, kind: input, shape index: {}]
  %s4 = inlined_call_operand.vmem [shape: f32[1,8], index: 4, kind: input, shape index: {}]
  %s5 = inlined_call_operand.hbm [shape: f32[2,8], index: 5, kind: output, shape index: {}]
  %s6 = sld [smem:[#allocation0]]
  $region30: #{tpu_custom_call.1} parent=0
    _
  %s8 = ssub.s32 1, %s6
  %s9 = scalar_select 0, %s8, %s6
  $region1: #{tpu_custom_call.1} parent=0
    #allocation2 [shape = 'u8[1024]{0}', space=vmem, size = 0x400, scoped, tag = 'output window, operand 0, single buffered']
    #allocation3 [shape = 's32[1]{0}', space=sflag, size = 0x4, scoped, tag = 'scoped memory for tpu_custom_call.1']
    %10 = vsyncpa [#allocation3], 0
    // Predicated region
    $region2: #{tpu_custom_call.1} parent=1 // pred_check
      _
    $region3: #{tpu_custom_call.1} parent=1 // pred_check_branch
      %12 = sbr.rel (0) target = $region5
    $region4: #{tpu_custom_call.1} parent=1 // pred_region
      _
    $region5: #{tpu_custom_call.1} parent=1 // pred_fallthru
      _
    // Predicated region
    $region6: #{tpu_custom_call.1} parent=1 // pred_check
      _
    $region7: #{tpu_custom_call.1} parent=1 // pred_check_branch
      %14 = sbr.rel (0) target = $region9
    $region8: #{tpu_custom_call.1} parent=1 // pred_region
      _
    $region9: #{tpu_custom_call.1} parent=1 // pred_fallthru
      _
    // Predicated region
    $region10: #{tpu_custom_call.1} parent=1 // pred_check
      _
    $region11: #{tpu_custom_call.1} parent=1 // pred_check_branch
      %16 = sbr.rel (0) target = $region13
    $region12: #{tpu_custom_call.1} parent=1 // pred_region
      _
    $region13: #{tpu_custom_call.1} parent=1 // pred_fallthru
      _
    // Predicated region
    $region14: #{tpu_custom_call.1} parent=1 // pred_check
      _
    $region15: #{tpu_custom_call.1} parent=1 // pred_check_branch
      %18 = sbr.rel (0) target = $region17
    $region16: #{tpu_custom_call.1} parent=1 // pred_region
      _
    $region17: #{tpu_custom_call.1} parent=1 // pred_fallthru
      _
    // Predicated region
    $region18: #{tpu_custom_call.1} parent=1 // pred_check
      _
    $region19: #{tpu_custom_call.1} parent=1 // pred_check_branch
      %20 = sbr.rel (0) target = $region21
    $region20: #{tpu_custom_call.1} parent=1 // pred_region
      _
    $region21: #{tpu_custom_call.1} parent=1 // pred_fallthru
      _
    %v22 = vld [vmem:[%s0] sm:$0xff]
    %v23 = vld [vmem:[%s0 + $0x8] sm:$0x3]
    %v24 = vld [vmem:[%s1] sm:$0xf]
    %v25 = vld [vmem:[%s1 + $0x4] sm:$0xf]
    %v26 = vld [vmem:[%s1 + $0x8] sm:$0xf]
    %v27 = vld [vmem:[%s1 + $0xc] sm:$0xf]
    %v28 = vld [vmem:[%s1 + $0x10] sm:$0xf]
    %v29 = vld [vmem:[%s1 + $0x14] sm:$0xf]
    %v30 = vld [vmem:[%s1 + $0x18] sm:$0xf]
    %v31 = vld [vmem:[%s1 + $0x1c] sm:$0xf]
    %v32 = vld [vmem:[%s1 + $0x20] sm:$0xf]
    %v33 = vld [vmem:[%s1 + $0x24] sm:$0xf]
    %v34 = vld [vmem:[%s1 + $0x28] sm:$0xf]
    %v35 = vld [vmem:[%s1 + $0x2c] sm:$0xf]
    %v36 = vld [vmem:[%s1 + $0x30] sm:$0xf]
    %v37 = vld [vmem:[%s1 + $0x34] sm:$0xf]
    %v38 = vld [vmem:[%s1 + $0x38] sm:$0xf]
    %v39 = vld [vmem:[%s1 + $0x3c] sm:$0xf]
    %v40 = vld [vmem:[%s1 + $0x40] sm:$0xf]
    %v41 = vld [vmem:[%s1 + $0x44] sm:$0xf]
    %v42 = vld [vmem:[%s1 + $0x48] sm:$0xf]
    %v43 = vld [vmem:[%s1 + $0x4c] sm:$0xf]
    %v44 = vld [vmem:[%s1 + $0x50] sm:$0xf]
    %v45 = vld [vmem:[%s1 + $0x54] sm:$0xf]
    %v46 = vld [vmem:[%s1 + $0x58] sm:$0xf]
    %v47 = vld [vmem:[%s1 + $0x5c] sm:$0xf]
    %v48 = vld [vmem:[%s1 + $0x60] sm:$0xf]
    %v49 = vld [vmem:[%s1 + $0x64] sm:$0xf]
    %v50 = vld [vmem:[%s1 + $0x68] sm:$0xf]
    %v51 = vld [vmem:[%s1 + $0x6c] sm:$0xf]
    %v52 = vld [vmem:[%s1 + $0x70] sm:$0xf]
    %v53 = vld [vmem:[%s1 + $0x74] sm:$0xf]
    %v54 = vld [vmem:[%s1 + $0x78] sm:$0xf]
    %v55 = vld [vmem:[%s1 + $0x7c] sm:$0xf]
    %v56 = vld [vmem:[%s1 + $0x80] sm:$0xf]
    %v57 = vld [vmem:[%s1 + $0x84] sm:$0xf]
    %v58 = vld [vmem:[%s1 + $0x88] sm:$0xf]
    %v59 = vld [vmem:[%s1 + $0x8c] sm:$0xf]
    %v60 = vld [vmem:[%s1 + $0x90] sm:$0xf]
    %v61 = vld [vmem:[%s1 + $0x94] sm:$0xf]
    %v62 = vld [vmem:[%s1 + $0x98] sm:$0xf]
    %v63 = vld [vmem:[%s1 + $0x9c] sm:$0xf]
    %v64 = vld [vmem:[%s1 + $0xa0] sm:$0xf]
    %v65 = vld [vmem:[%s1 + $0xa4] sm:$0xf]
    %v66 = vld [vmem:[%s1 + $0xa8] sm:$0xf]
    %v67 = vld [vmem:[%s1 + $0xac] sm:$0xf]
    %v68 = vld [vmem:[%s1 + $0xb0] sm:$0xf]
    %v69 = vld [vmem:[%s1 + $0xb4] sm:$0xf]
    %v70 = vld [vmem:[%s1 + $0xb8] sm:$0xf]
    %v71 = vld [vmem:[%s1 + $0xbc] sm:$0xf]
    %v72 = vld [vmem:[%s1 + $0xc0] sm:$0xf]
    %v73 = vld [vmem:[%s1 + $0xc4] sm:$0xf]
    %v74 = vld [vmem:[%s1 + $0xc8] sm:$0xf]
    %v75 = vld [vmem:[%s1 + $0xcc] sm:$0xf]
    %v76 = vld [vmem:[%s1 + $0xd0] sm:$0xf]
    %v77 = vld [vmem:[%s1 + $0xd4] sm:$0xf]
    %v78 = vld [vmem:[%s1 + $0xd8] sm:$0xf]
    %v79 = vld [vmem:[%s1 + $0xdc] sm:$0xf]
    %v80 = vld [vmem:[%s1 + $0xe0] sm:$0xf]
    %v81 = vld [vmem:[%s1 + $0xe4] sm:$0xf]
    %v82 = vld [vmem:[%s1 + $0xe8] sm:$0xf]
    %v83 = vld [vmem:[%s1 + $0xec] sm:$0xf]
    %v84 = vld [vmem:[%s1 + $0xf0] sm:$0xf]
    %v85 = vld [vmem:[%s1 + $0xf4] sm:$0xf]
    %v86 = vld [vmem:[%s1 + $0xf8] sm:$0xf]
    %v87 = vld [vmem:[%s1 + $0xfc] sm:$0xf]
    %v88 = vld [vmem:[%s1 + $0x100] sm:$0xf]
    %v89 = vld [vmem:[%s1 + $0x104] sm:$0xf]
    %v90 = vld [vmem:[%s1 + $0x108] sm:$0xf]
    %v91 = vld [vmem:[%s1 + $0x10c] sm:$0xf]
    %v92 = vld [vmem:[%s1 + $0x110] sm:$0xf]
    %v93 = vld [vmem:[%s1 + $0x114] sm:$0xf]
    %v94 = vld [vmem:[%s1 + $0x118] sm:$0xf]
    %v95 = vld [vmem:[%s1 + $0x11c] sm:$0xf]
    %v96 = vld [vmem:[%s1 + $0x120] sm:$0xf]
    %v97 = vld [vmem:[%s1 + $0x124] sm:$0xf]
    %v98 = vld [vmem:[%s1 + $0x128] sm:$0xf]
    %v99 = vld [vmem:[%s1 + $0x12c] sm:$0xf]
    %v100 = vld [vmem:[%s1 + $0x130] sm:$0xf]
    %v101 = vld [vmem:[%s1 + $0x134] sm:$0xf]
    %v102 = vld [vmem:[%s1 + $0x138] sm:$0xf]
    %v103 = vld [vmem:[%s1 + $0x13c] sm:$0xf]
    %v104 = vld [vmem:[%s1 + $0x140] sm:$0xf]
    %v105 = vld [vmem:[%s1 + $0x144] sm:$0xf]
    %v106 = vld [vmem:[%s1 + $0x148] sm:$0xf]
    %v107 = vld [vmem:[%s1 + $0x14c] sm:$0xf]
    %v108 = vld [vmem:[%s1 + $0x150] sm:$0xf]
    %v109 = vld [vmem:[%s1 + $0x154] sm:$0xf]
    %v110 = vld [vmem:[%s1 + $0x158] sm:$0xf]
    %v111 = vld [vmem:[%s1 + $0x15c] sm:$0xf]
    %v112 = vld [vmem:[%s1 + $0x160] sm:$0xf]
    %v113 = vld [vmem:[%s1 + $0x164] sm:$0xf]
    %v114 = vld [vmem:[%s1 + $0x168] sm:$0xf]
    %v115 = vld [vmem:[%s1 + $0x16c] sm:$0xf]
    %v116 = vld [vmem:[%s1 + $0x170] sm:$0xf]
    %v117 = vld [vmem:[%s1 + $0x174] sm:$0xf]
    %v118 = vld [vmem:[%s1 + $0x178] sm:$0xf]
    %v119 = vld [vmem:[%s1 + $0x17c] sm:$0xf]
    %v120 = vld [vmem:[%s1 + $0x180] sm:$0xf]
    %v121 = vld [vmem:[%s1 + $0x184] sm:$0xf]
    %v122 = vld [vmem:[%s1 + $0x188] sm:$0xf]
    %v123 = vld [vmem:[%s1 + $0x18c] sm:$0xf]
    %v124 = vld [vmem:[%s1 + $0x190] sm:$0xf]
    %v125 = vld [vmem:[%s1 + $0x194] sm:$0xf]
    %v126 = vld [vmem:[%s1 + $0x198] sm:$0xf]
    %v127 = vld [vmem:[%s1 + $0x19c] sm:$0xf]
    %v128 = vld [vmem:[%s1 + $0x1a0] sm:$0xf]
    %v129 = vld [vmem:[%s1 + $0x1a4] sm:$0xf]
    %v130 = vld [vmem:[%s1 + $0x1a8] sm:$0xf]
    %v131 = vld [vmem:[%s1 + $0x1ac] sm:$0xf]
    %v132 = vld [vmem:[%s1 + $0x1b0] sm:$0xf]
    %v133 = vld [vmem:[%s1 + $0x1b4] sm:$0xf]
    %v134 = vld [vmem:[%s1 + $0x1b8] sm:$0xf]
    %v135 = vld [vmem:[%s1 + $0x1bc] sm:$0xf]
    %v136 = vld [vmem:[%s1 + $0x1c0] sm:$0xf]
    %v137 = vld [vmem:[%s1 + $0x1c4] sm:$0xf]
    %v138 = vld [vmem:[%s1 + $0x1c8] sm:$0xf]
    %v139 = vld [vmem:[%s1 + $0x1cc] sm:$0xf]
    %v140 = vld [vmem:[%s1 + $0x1d0] sm:$0xf]
    %v141 = vld [vmem:[%s1 + $0x1d4] sm:$0xf]
    %v142 = vld [vmem:[%s1 + $0x1d8] sm:$0xf]
    %v143 = vld [vmem:[%s1 + $0x1dc] sm:$0xf]
    %v144 = vld [vmem:[%s1 + $0x1e0] sm:$0xf]
    %v145 = vld [vmem:[%s1 + $0x1e4] sm:$0xf]
    %v146 = vld [vmem:[%s1 + $0x1e8] sm:$0xf]
    %v147 = vld [vmem:[%s1 + $0x1ec] sm:$0xf]
    %v148 = vld [vmem:[%s1 + $0x1f0] sm:$0xf]
    %v149 = vld [vmem:[%s1 + $0x1f4] sm:$0xf]
    %v150 = vld [vmem:[%s1 + $0x1f8] sm:$0xf]
    %v151 = vld [vmem:[%s1 + $0x1fc] sm:$0xf]
    %v152 = vld [vmem:[%s1 + $0x200] sm:$0xf]
    %v153 = vld [vmem:[%s1 + $0x204] sm:$0xf]
    %v154 = vld [vmem:[%s1 + $0x208] sm:$0xf]
    %v155 = vld [vmem:[%s1 + $0x20c] sm:$0xf]
    %v156 = vld [vmem:[%s1 + $0x210] sm:$0xf]
    %v157 = vld [vmem:[%s1 + $0x214] sm:$0xf]
    %v158 = vld [vmem:[%s1 + $0x218] sm:$0xf]
    %v159 = vld [vmem:[%s1 + $0x21c] sm:$0xf]
    %v160 = vld [vmem:[%s1 + $0x220] sm:$0xf]
    %v161 = vld [vmem:[%s1 + $0x224] sm:$0xf]
    %v162 = vld [vmem:[%s1 + $0x228] sm:$0xf]
    %v163 = vld [vmem:[%s1 + $0x22c] sm:$0xf]
    %v164 = vld [vmem:[%s1 + $0x230] sm:$0xf]
    %v165 = vld [vmem:[%s1 + $0x234] sm:$0xf]
    %v166 = vld [vmem:[%s1 + $0x238] sm:$0xf]
    %v167 = vld [vmem:[%s1 + $0x23c] sm:$0xf]
    %v168 = vld [vmem:[%s1 + $0x240] sm:$0xf]
    %v169 = vld [vmem:[%s1 + $0x244] sm:$0xf]
    %v170 = vld [vmem:[%s1 + $0x248] sm:$0xf]
    %v171 = vld [vmem:[%s1 + $0x24c] sm:$0xf]
    %v172 = vld [vmem:[%s1 + $0x250] sm:$0xf]
    %v173 = vld [vmem:[%s1 + $0x254] sm:$0xf]
    %v174 = vld [vmem:[%s1 + $0x258] sm:$0xf]
    %v175 = vld [vmem:[%s1 + $0x25c] sm:$0xf]
    %v176 = vld [vmem:[%s1 + $0x260] sm:$0xf]
    %v177 = vld [vmem:[%s1 + $0x264] sm:$0xf]
    %v178 = vld [vmem:[%s1 + $0x268] sm:$0xf]
    %v179 = vld [vmem:[%s1 + $0x26c] sm:$0xf]
    %v180 = vld [vmem:[%s1 + $0x270] sm:$0xf]
    %v181 = vld [vmem:[%s1 + $0x274] sm:$0xf]
    %v182 = vld [vmem:[%s1 + $0x278] sm:$0xf]
    %v183 = vld [vmem:[%s1 + $0x27c] sm:$0xf]
    %v184 = vld [vmem:[%s2] sm:$0x1]
    %v186 = vlaneseq
    %v187 = vshrl.u32 %v186, 7
    %v188 = vsub.s32 0, %v187
    %v189 = vrot.slane %v184, %v188
    %v193 = vcombine.high %v22, %v22
    %v195 = vunpack.c.l.s4 1966171168
    %v196 = vunpack.c.0.s8 %v195
    %v197 = vlaneseq
    %v198 = vshrl.u32 %v197, 7
    %v199 = vsub.s32 %v196, %v198
    %v200 = vrot.slane %v22, %v199
    %v202 = vunpack.c.l.s4 1966171168
    %v203 = vunpack.c.0.s8 %v202
    %v204 = vlaneseq
    %v205 = vshrl.u32 %v204, 7
    %v206 = vsub.s32 %v203, %v205
    %v207 = vrot.slane %v193, %v206
    %v208 = vcombine.high %v200, %v200
    %v209 = vcombine.high %v207, %v207
    %v211 = vunpack.c.l.s4 1966171168
    %v212 = vunpack.c.0.s8 %v211
    %v213 = vlaneseq
    %v214 = vshrl.u32 %v213, 7
    %v215 = vsub.s32 %v212, %v214
    %v216 = vrot.slane %v200, %v215
    %v218 = vunpack.c.l.s4 1966171168
    %v219 = vunpack.c.0.s8 %v218
    %v220 = vlaneseq
    %v221 = vshrl.u32 %v220, 7
    %v222 = vsub.s32 %v219, %v221
    %v223 = vrot.slane %v207, %v222
    %v225 = vunpack.c.l.s4 1966171168
    %v226 = vunpack.c.0.s8 %v225
    %v227 = vlaneseq
    %v228 = vshrl.u32 %v227, 7
    %v229 = vsub.s32 %v226, %v228
    %v230 = vrot.slane %v208, %v229
    %v232 = vunpack.c.l.s4 1966171168
    %v233 = vunpack.c.0.s8 %v232
    %v234 = vlaneseq
    %v235 = vshrl.u32 %v234, 7
    %v236 = vsub.s32 %v233, %v235
    %v237 = vrot.slane %v209, %v236
    %v238 = vcombine.high %v216, %v216
    %v239 = vcombine.high %v223, %v223
    %v240 = vcombine.high %v230, %v230
    %v241 = vcombine.high %v237, %v237
    %v243 = vunpack.c.l.s4 1966171168
    %v244 = vunpack.c.0.s8 %v243
    %v245 = vlaneseq
    %v246 = vshrl.u32 %v245, 7
    %v247 = vsub.s32 %v244, %v246
    %v248 = vrot.slane %v23, %v247
    %v249 = vcombine.high %v248, %v248
    %v251 = vunpack.c.l.s4 1966171168
    %v252 = vunpack.c.0.s8 %v251
    %v253 = vlaneseq
    %v254 = vshrl.u32 %v253, 7
    %v255 = vsub.s32 %v252, %v254
    %v256 = vrot.slane %v248, %v255
    %v258 = vunpack.c.l.s4 1966171168
    %v259 = vunpack.c.0.s8 %v258
    %v260 = vlaneseq
    %v261 = vshrl.u32 %v260, 7
    %v262 = vsub.s32 %v259, %v261
    %v263 = vrot.slane %v249, %v262
    %v434 = vunpack.c.l.b16 %v24
    %v435 = vunpack.c.l.b16 %v25
    %v436 = vunpack.c.l.b16 %v26
    %v437 = vunpack.c.l.b16 %v27
    %v438 = vunpack.c.l.b16 %v28
    %v439 = vunpack.c.l.b16 %v29
    %v440 = vunpack.c.l.b16 %v30
    %v441 = vunpack.c.l.b16 %v31
    %v442 = vunpack.c.l.b16 %v32
    %v443 = vunpack.c.l.b16 %v33
    %v444 = vunpack.c.l.b16 %v34
    %v445 = vunpack.c.l.b16 %v35
    %v446 = vunpack.c.l.b16 %v36
    %v447 = vunpack.c.l.b16 %v37
    %v448 = vunpack.c.l.b16 %v38
    %v449 = vunpack.c.l.b16 %v39
    %v450 = vunpack.c.l.b16 %v40
    %v451 = vunpack.c.l.b16 %v41
    %v452 = vunpack.c.l.b16 %v42
    %v453 = vunpack.c.l.b16 %v43
    %v454 = vunpack.c.l.b16 %v44
    %v455 = vunpack.c.l.b16 %v45
    %v456 = vunpack.c.l.b16 %v46
    %v457 = vunpack.c.l.b16 %v47
    %v458 = vunpack.c.l.b16 %v48
    %v459 = vunpack.c.l.b16 %v49
    %v460 = vunpack.c.l.b16 %v50
    %v461 = vunpack.c.l.b16 %v51
    %v462 = vunpack.c.l.b16 %v52
    %v463 = vunpack.c.l.b16 %v53
    %v464 = vunpack.c.l.b16 %v54
    %v465 = vunpack.c.l.b16 %v55
    %v466 = vunpack.c.l.b16 %v56
    %v467 = vunpack.c.l.b16 %v57
    %v468 = vunpack.c.l.b16 %v58
    %v469 = vunpack.c.l.b16 %v59
    %v470 = vunpack.c.l.b16 %v60
    %v471 = vunpack.c.l.b16 %v61
    %v472 = vunpack.c.l.b16 %v62
    %v473 = vunpack.c.l.b16 %v63
    %v474 = vunpack.c.l.b16 %v64
    %v475 = vunpack.c.l.b16 %v65
    %v476 = vunpack.c.l.b16 %v66
    %v477 = vunpack.c.l.b16 %v67
    %v478 = vunpack.c.l.b16 %v68
    %v479 = vunpack.c.l.b16 %v69
    %v480 = vunpack.c.l.b16 %v70
    %v481 = vunpack.c.l.b16 %v71
    %v482 = vunpack.c.l.b16 %v72
    %v483 = vunpack.c.l.b16 %v73
    %v484 = vunpack.c.l.b16 %v74
    %v485 = vunpack.c.l.b16 %v75
    %v486 = vunpack.c.l.b16 %v76
    %v487 = vunpack.c.l.b16 %v77
    %v488 = vunpack.c.l.b16 %v78
    %v489 = vunpack.c.l.b16 %v79
    %v490 = vunpack.c.l.b16 %v80
    %v491 = vunpack.c.l.b16 %v81
    %v492 = vunpack.c.l.b16 %v82
    %v493 = vunpack.c.l.b16 %v83
    %v494 = vunpack.c.l.b16 %v84
    %v495 = vunpack.c.l.b16 %v85
    %v496 = vunpack.c.l.b16 %v86
    %v497 = vunpack.c.l.b16 %v87
    %v498 = vunpack.c.l.b16 %v88
    %v499 = vunpack.c.l.b16 %v89
    %v500 = vunpack.c.l.b16 %v90
    %v501 = vunpack.c.l.b16 %v91
    %v502 = vunpack.c.l.b16 %v92
    %v503 = vunpack.c.l.b16 %v93
    %v504 = vunpack.c.l.b16 %v94
    %v505 = vunpack.c.l.b16 %v95
    %v506 = vunpack.c.l.b16 %v96
    %v507 = vunpack.c.l.b16 %v97
    %v508 = vunpack.c.l.b16 %v98
    %v509 = vunpack.c.l.b16 %v99
    %v510 = vunpack.c.l.b16 %v100
    %v511 = vunpack.c.l.b16 %v101
    %v512 = vunpack.c.l.b16 %v102
    %v513 = vunpack.c.l.b16 %v103
    %v514 = vunpack.c.l.b16 %v104
    %v515 = vunpack.c.l.b16 %v105
    %v516 = vunpack.c.l.b16 %v106
    %v517 = vunpack.c.l.b16 %v107
    %v518 = vunpack.c.l.b16 %v108
    %v519 = vunpack.c.l.b16 %v109
    %v520 = vunpack.c.l.b16 %v110
    %v521 = vunpack.c.l.b16 %v111
    %v522 = vunpack.c.l.b16 %v112
    %v523 = vunpack.c.l.b16 %v113
    %v524 = vunpack.c.l.b16 %v114
    %v525 = vunpack.c.l.b16 %v115
    %v526 = vunpack.c.l.b16 %v116
    %v527 = vunpack.c.l.b16 %v117
    %v528 = vunpack.c.l.b16 %v118
    %v529 = vunpack.c.l.b16 %v119
    %v530 = vunpack.c.l.b16 %v120
    %v531 = vunpack.c.l.b16 %v121
    %v532 = vunpack.c.l.b16 %v122
    %v533 = vunpack.c.l.b16 %v123
    %v534 = vunpack.c.l.b16 %v124
    %v535 = vunpack.c.l.b16 %v125
    %v536 = vunpack.c.l.b16 %v126
    %v537 = vunpack.c.l.b16 %v127
    %v538 = vunpack.c.l.b16 %v128
    %v539 = vunpack.c.l.b16 %v129
    %v540 = vunpack.c.l.b16 %v130
    %v541 = vunpack.c.l.b16 %v131
    %v542 = vunpack.c.l.b16 %v132
    %v543 = vunpack.c.l.b16 %v133
    %v544 = vunpack.c.l.b16 %v134
    %v545 = vunpack.c.l.b16 %v135
    %v546 = vunpack.c.l.b16 %v136
    %v547 = vunpack.c.l.b16 %v137
    %v548 = vunpack.c.l.b16 %v138
    %v549 = vunpack.c.l.b16 %v139
    %v550 = vunpack.c.l.b16 %v140
    %v551 = vunpack.c.l.b16 %v141
    %v552 = vunpack.c.l.b16 %v142
    %v553 = vunpack.c.l.b16 %v143
    %v554 = vunpack.c.l.b16 %v144
    %v555 = vunpack.c.l.b16 %v145
    %v556 = vunpack.c.l.b16 %v146
    %v557 = vunpack.c.l.b16 %v147
    %v558 = vunpack.c.l.b16 %v148
    %v559 = vunpack.c.l.b16 %v149
    %v560 = vunpack.c.l.b16 %v150
    %v561 = vunpack.c.l.b16 %v151
    %v562 = vunpack.c.l.b16 %v152
    %v563 = vunpack.c.l.b16 %v153
    %v564 = vunpack.c.l.b16 %v154
    %v565 = vunpack.c.l.b16 %v155
    %v566 = vunpack.c.l.b16 %v156
    %v567 = vunpack.c.l.b16 %v157
    %v568 = vunpack.c.l.b16 %v158
    %v569 = vunpack.c.l.b16 %v159
    %v570 = vunpack.c.l.b16 %v160
    %v571 = vunpack.c.l.b16 %v161
    %v572 = vunpack.c.l.b16 %v162
    %v573 = vunpack.c.l.b16 %v163
    %v574 = vunpack.c.l.b16 %v164
    %v575 = vunpack.c.l.b16 %v165
    %v576 = vunpack.c.l.b16 %v166
    %v577 = vunpack.c.l.b16 %v167
    %v578 = vunpack.c.l.b16 %v168
    %v579 = vunpack.c.l.b16 %v169
    %v580 = vunpack.c.l.b16 %v170
    %v581 = vunpack.c.l.b16 %v171
    %v582 = vunpack.c.l.b16 %v172
    %v583 = vunpack.c.l.b16 %v173
    %v584 = vunpack.c.l.b16 %v174
    %v585 = vunpack.c.l.b16 %v175
    %v586 = vunpack.c.l.b16 %v176
    %v587 = vunpack.c.l.b16 %v177
    %v588 = vunpack.c.l.b16 %v178
    %v589 = vunpack.c.l.b16 %v179
    %v590 = vunpack.c.l.b16 %v180
    %v591 = vunpack.c.l.b16 %v181
    %v592 = vunpack.c.l.b16 %v182
    %v593 = vunpack.c.l.b16 %v183
    %v594 = vpack.c.b16 %v435, %v434
    %v595 = vpack.c.b16 %v437, %v436
    %v596 = vpack.c.b16 %v439, %v438
    %v597 = vpack.c.b16 %v441, %v440
    %v598 = vpack.c.b16 %v443, %v442
    %v599 = vpack.c.b16 %v445, %v444
    %v600 = vpack.c.b16 %v447, %v446
    %v601 = vpack.c.b16 %v449, %v448
    %v602 = vpack.c.b16 %v451, %v450
    %v603 = vpack.c.b16 %v453, %v452
    %v604 = vpack.c.b16 %v455, %v454
    %v605 = vpack.c.b16 %v457, %v456
    %v606 = vpack.c.b16 %v459, %v458
    %v607 = vpack.c.b16 %v461, %v460
    %v608 = vpack.c.b16 %v463, %v462
    %v609 = vpack.c.b16 %v465, %v464
    %v610 = vpack.c.b16 %v467, %v466
    %v611 = vpack.c.b16 %v469, %v468
    %v612 = vpack.c.b16 %v471, %v470
    %v613 = vpack.c.b16 %v473, %v472
    %v614 = vpack.c.b16 %v475, %v474
    %v615 = vpack.c.b16 %v477, %v476
    %v616 = vpack.c.b16 %v479, %v478
    %v617 = vpack.c.b16 %v481, %v480
    %v618 = vpack.c.b16 %v483, %v482
    %v619 = vpack.c.b16 %v485, %v484
    %v620 = vpack.c.b16 %v487, %v486
    %v621 = vpack.c.b16 %v489, %v488
    %v622 = vpack.c.b16 %v491, %v490
    %v623 = vpack.c.b16 %v493, %v492
    %v624 = vpack.c.b16 %v495, %v494
    %v625 = vpack.c.b16 %v497, %v496
    %v626 = vpack.c.b16 %v499, %v498
    %v627 = vpack.c.b16 %v501, %v500
    %v628 = vpack.c.b16 %v503, %v502
    %v629 = vpack.c.b16 %v505, %v504
    %v630 = vpack.c.b16 %v507, %v506
    %v631 = vpack.c.b16 %v509, %v508
    %v632 = vpack.c.b16 %v511, %v510
    %v633 = vpack.c.b16 %v513, %v512
    %v634 = vpack.c.b16 %v515, %v514
    %v635 = vpack.c.b16 %v517, %v516
    %v636 = vpack.c.b16 %v519, %v518
    %v637 = vpack.c.b16 %v521, %v520
    %v638 = vpack.c.b16 %v523, %v522
    %v639 = vpack.c.b16 %v525, %v524
    %v640 = vpack.c.b16 %v527, %v526
    %v641 = vpack.c.b16 %v529, %v528
    %v642 = vpack.c.b16 %v531, %v530
    %v643 = vpack.c.b16 %v533, %v532
    %v644 = vpack.c.b16 %v535, %v534
    %v645 = vpack.c.b16 %v537, %v536
    %v646 = vpack.c.b16 %v539, %v538
    %v647 = vpack.c.b16 %v541, %v540
    %v648 = vpack.c.b16 %v543, %v542
    %v649 = vpack.c.b16 %v545, %v544
    %v650 = vpack.c.b16 %v547, %v546
    %v651 = vpack.c.b16 %v549, %v548
    %v652 = vpack.c.b16 %v551, %v550
    %v653 = vpack.c.b16 %v553, %v552
    %v654 = vpack.c.b16 %v555, %v554
    %v655 = vpack.c.b16 %v557, %v556
    %v656 = vpack.c.b16 %v559, %v558
    %v657 = vpack.c.b16 %v561, %v560
    %v658 = vpack.c.b16 %v563, %v562
    %v659 = vpack.c.b16 %v565, %v564
    %v660 = vpack.c.b16 %v567, %v566
    %v661 = vpack.c.b16 %v569, %v568
    %v662 = vpack.c.b16 %v571, %v570
    %v663 = vpack.c.b16 %v573, %v572
    %v664 = vpack.c.b16 %v575, %v574
    %v665 = vpack.c.b16 %v577, %v576
    %v666 = vpack.c.b16 %v579, %v578
    %v667 = vpack.c.b16 %v581, %v580
    %v668 = vpack.c.b16 %v583, %v582
    %v669 = vpack.c.b16 %v585, %v584
    %v670 = vpack.c.b16 %v587, %v586
    %v671 = vpack.c.b16 %v589, %v588
    %v672 = vpack.c.b16 %v591, %v590
    %v673 = vpack.c.b16 %v593, %v592
    %754 = vmatprep.subr.bf16.mxu0 0
    %755 = vmatpush1.bf16.msra.mxu0 %v594
    %756 = vmatprep.subr.bf16.mxu0 0
    %757 = vmatpush1.bf16.msra.mxu0 %v595
    %758 = vmatprep.subr.bf16.mxu0 0
    %759 = vmatpush1.bf16.msra.mxu0 %v596
    %760 = vmatprep.subr.bf16.mxu0 0
    %761 = vmatpush1.bf16.msra.mxu0 %v597
    %762 = vmatprep.subr.bf16.mxu0 0
    %763 = vmatpush1.bf16.msra.mxu0 %v598
    %764 = vmatprep.subr.bf16.mxu0 0
    %765 = vmatpush1.bf16.msra.mxu0 %v599
    %766 = vmatprep.subr.bf16.mxu0 0
    %767 = vmatpush1.bf16.msra.mxu0 %v600
    %768 = vmatprep.subr.bf16.mxu0 0
    %769 = vmatpush1.bf16.msra.mxu0 %v601
    %770 = vmatprep.subr.bf16.mxu0 0
    %771 = vmatpush1.bf16.msra.mxu0 %v602
    %772 = vmatprep.subr.bf16.mxu0 0
    %773 = vmatpush1.bf16.msra.mxu0 %v603
    %774 = vmatprep.subr.bf16.mxu0 0
    %775 = vmatpush1.bf16.msra.mxu0 %v604
    %776 = vmatprep.subr.bf16.mxu0 0
    %777 = vmatpush1.bf16.msra.mxu0 %v605
    %778 = vmatprep.subr.bf16.mxu0 0
    %779 = vmatpush1.bf16.msra.mxu0 %v606
    %780 = vmatprep.subr.bf16.mxu0 0
    %781 = vmatpush1.bf16.msra.mxu0 %v607
    %782 = vmatprep.subr.bf16.mxu0 0
    %783 = vmatpush1.bf16.msra.mxu0 %v608
    %784 = vmatprep.subr.bf16.mxu0 0
    %785 = vmatpush1.bf16.msra.mxu0 %v609
    %786 = vmatprep.mubr.bf16.mxu0 %v230
    %787 = vmatmul.mubr.bf16.gmra.mrb[0].mxu0 %v216
    %v788 = vpop.f32.mrb[0].mxu0
    %v789 = vadd.f32 %v189, %v788
    %v790 = vpop.f32.mrb[0].mxu0
    %v791 = vpop.f32.mrb[0].mxu0
    %v792 = vpop.f32.mrb[0].mxu0
    %793 = vdwg.mxu0
    %794 = vmatprep.subr.bf16.mxu0 0
    %795 = vmatpush1.bf16.msra.mxu0 %v610
    %796 = vmatprep.subr.bf16.mxu0 0
    %797 = vmatpush1.bf16.msra.mxu0 %v611
    %798 = vmatprep.subr.bf16.mxu0 0
    %799 = vmatpush1.bf16.msra.mxu0 %v612
    %800 = vmatprep.subr.bf16.mxu0 0
    %801 = vmatpush1.bf16.msra.mxu0 %v613
    %802 = vmatprep.subr.bf16.mxu0 0
    %803 = vmatpush1.bf16.msra.mxu0 %v614
    %804 = vmatprep.subr.bf16.mxu0 0
    %805 = vmatpush1.bf16.msra.mxu0 %v615
    %806 = vmatprep.subr.bf16.mxu0 0
    %807 = vmatpush1.bf16.msra.mxu0 %v616
    %808 = vmatprep.subr.bf16.mxu0 0
    %809 = vmatpush1.bf16.msra.mxu0 %v617
    %810 = vmatprep.subr.bf16.mxu0 0
    %811 = vmatpush1.bf16.msra.mxu0 %v618
    %812 = vmatprep.subr.bf16.mxu0 0
    %813 = vmatpush1.bf16.msra.mxu0 %v619
    %814 = vmatprep.subr.bf16.mxu0 0
    %815 = vmatpush1.bf16.msra.mxu0 %v620
    %816 = vmatprep.subr.bf16.mxu0 0
    %817 = vmatpush1.bf16.msra.mxu0 %v621
    %818 = vmatprep.subr.bf16.mxu0 0
    %819 = vmatpush1.bf16.msra.mxu0 %v622
    %820 = vmatprep.subr.bf16.mxu0 0
    %821 = vmatpush1.bf16.msra.mxu0 %v623
    %822 = vmatprep.subr.bf16.mxu0 0
    %823 = vmatpush1.bf16.msra.mxu0 %v624
    %824 = vmatprep.subr.bf16.mxu0 0
    %825 = vmatpush1.bf16.msra.mxu0 %v625
    %826 = vmatprep.mubr.bf16.mxu0 %v240
    %827 = vmatmul.mubr.bf16.gmra.mrb[0].mxu0 %v238
    %v828 = vpop.f32.mrb[0].mxu0
    %v829 = vadd.f32 %v789, %v828
    %v830 = vpop.f32.mrb[0].mxu0
    %v831 = vpop.f32.mrb[0].mxu0
    %v832 = vpop.f32.mrb[0].mxu0
    %833 = vdwg.mxu0
    %834 = vmatprep.subr.bf16.mxu0 0
    %835 = vmatpush1.bf16.msra.mxu0 %v626
    %836 = vmatprep.subr.bf16.mxu0 0
    %837 = vmatpush1.bf16.msra.mxu0 %v627
    %838 = vmatprep.subr.bf16.mxu0 0
    %839 = vmatpush1.bf16.msra.mxu0 %v628
    %840 = vmatprep.subr.bf16.mxu0 0
    %841 = vmatpush1.bf16.msra.mxu0 %v629
    %842 = vmatprep.subr.bf16.mxu0 0
    %843 = vmatpush1.bf16.msra.mxu0 %v630
    %844 = vmatprep.subr.bf16.mxu0 0
    %845 = vmatpush1.bf16.msra.mxu0 %v631
    %846 = vmatprep.subr.bf16.mxu0 0
    %847 = vmatpush1.bf16.msra.mxu0 %v632
    %848 = vmatprep.subr.bf16.mxu0 0
    %849 = vmatpush1.bf16.msra.mxu0 %v633
    %850 = vmatprep.subr.bf16.mxu0 0
    %851 = vmatpush1.bf16.msra.mxu0 %v634
    %852 = vmatprep.subr.bf16.mxu0 0
    %853 = vmatpush1.bf16.msra.mxu0 %v635
    %854 = vmatprep.subr.bf16.mxu0 0
    %855 = vmatpush1.bf16.msra.mxu0 %v636
    %856 = vmatprep.subr.bf16.mxu0 0
    %857 = vmatpush1.bf16.msra.mxu0 %v637
    %858 = vmatprep.subr.bf16.mxu0 0
    %859 = vmatpush1.bf16.msra.mxu0 %v638
    %860 = vmatprep.subr.bf16.mxu0 0
    %861 = vmatpush1.bf16.msra.mxu0 %v639
    %862 = vmatprep.subr.bf16.mxu0 0
    %863 = vmatpush1.bf16.msra.mxu0 %v640
    %864 = vmatprep.subr.bf16.mxu0 0
    %865 = vmatpush1.bf16.msra.mxu0 %v641
    %866 = vmatprep.mubr.bf16.mxu0 %v237
    %867 = vmatmul.mubr.bf16.gmra.mrb[0].mxu0 %v223
    %v868 = vpop.f32.mrb[0].mxu0
    %v869 = vadd.f32 %v829, %v868
    %v870 = vpop.f32.mrb[0].mxu0
    %v871 = vpop.f32.mrb[0].mxu0
    %v872 = vpop.f32.mrb[0].mxu0
    %873 = vdwg.mxu0
    %874 = vmatprep.subr.bf16.mxu0 0
    %875 = vmatpush1.bf16.msra.mxu0 %v642
    %876 = vmatprep.subr.bf16.mxu0 0
    %877 = vmatpush1.bf16.msra.mxu0 %v643
    %878 = vmatprep.subr.bf16.mxu0 0
    %879 = vmatpush1.bf16.msra.mxu0 %v644
    %880 = vmatprep.subr.bf16.mxu0 0
    %881 = vmatpush1.bf16.msra.mxu0 %v645
    %882 = vmatprep.subr.bf16.mxu0 0
    %883 = vmatpush1.bf16.msra.mxu0 %v646
    %884 = vmatprep.subr.bf16.mxu0 0
    %885 = vmatpush1.bf16.msra.mxu0 %v647
    %886 = vmatprep.subr.bf16.mxu0 0
    %887 = vmatpush1.bf16.msra.mxu0 %v648
    %888 = vmatprep.subr.bf16.mxu0 0
    %889 = vmatpush1.bf16.msra.mxu0 %v649
    %890 = vmatprep.subr.bf16.mxu0 0
    %891 = vmatpush1.bf16.msra.mxu0 %v650
    %892 = vmatprep.subr.bf16.mxu0 0
    %893 = vmatpush1.bf16.msra.mxu0 %v651
    %894 = vmatprep.subr.bf16.mxu0 0
    %895 = vmatpush1.bf16.msra.mxu0 %v652
    %896 = vmatprep.subr.bf16.mxu0 0
    %897 = vmatpush1.bf16.msra.mxu0 %v653
    %898 = vmatprep.subr.bf16.mxu0 0
    %899 = vmatpush1.bf16.msra.mxu0 %v654
    %900 = vmatprep.subr.bf16.mxu0 0
    %901 = vmatpush1.bf16.msra.mxu0 %v655
    %902 = vmatprep.subr.bf16.mxu0 0
    %903 = vmatpush1.bf16.msra.mxu0 %v656
    %904 = vmatprep.subr.bf16.mxu0 0
    %905 = vmatpush1.bf16.msra.mxu0 %v657
    %906 = vmatprep.mubr.bf16.mxu0 %v241
    %907 = vmatmul.mubr.bf16.gmra.mrb[0].mxu0 %v239
    %v908 = vpop.f32.mrb[0].mxu0
    %v909 = vadd.f32 %v869, %v908
    %v910 = vpop.f32.mrb[0].mxu0
    %v911 = vpop.f32.mrb[0].mxu0
    %v912 = vpop.f32.mrb[0].mxu0
    %913 = vdwg.mxu0
    %914 = vmatprep.subr.bf16.mxu0 0
    %915 = vmatpush1.bf16.msra.mxu0 %v658
    %916 = vmatprep.subr.bf16.mxu0 0
    %917 = vmatpush1.bf16.msra.mxu0 %v659
    %918 = vmatprep.subr.bf16.mxu0 0
    %919 = vmatpush1.bf16.msra.mxu0 %v660
    %920 = vmatprep.subr.bf16.mxu0 0
    %921 = vmatpush1.bf16.msra.mxu0 %v661
    %922 = vmatprep.subr.bf16.mxu0 0
    %923 = vmatpush1.bf16.msra.mxu0 %v662
    %924 = vmatprep.subr.bf16.mxu0 0
    %925 = vmatpush1.bf16.msra.mxu0 %v663
    %926 = vmatprep.subr.bf16.mxu0 0
    %927 = vmatpush1.bf16.msra.mxu0 %v664
    %928 = vmatprep.subr.bf16.mxu0 0
    %929 = vmatpush1.bf16.msra.mxu0 %v665
    %930 = vmatprep.subr.bf16.mxu0 0
    %931 = vmatpush1.bf16.msra.mxu0 %v666
    %932 = vmatprep.subr.bf16.mxu0 0
    %933 = vmatpush1.bf16.msra.mxu0 %v667
    %934 = vmatprep.subr.bf16.mxu0 0
    %935 = vmatpush1.bf16.msra.mxu0 %v668
    %936 = vmatprep.subr.bf16.mxu0 0
    %937 = vmatpush1.bf16.msra.mxu0 %v669
    %938 = vmatprep.subr.bf16.mxu0 0
    %939 = vmatpush1.bf16.msra.mxu0 %v670
    %940 = vmatprep.subr.bf16.mxu0 0
    %941 = vmatpush1.bf16.msra.mxu0 %v671
    %942 = vmatprep.subr.bf16.mxu0 0
    %943 = vmatpush1.bf16.msra.mxu0 %v672
    %944 = vmatprep.subr.bf16.mxu0 0
    %945 = vmatpush1.bf16.msra.mxu0 %v673
    %946 = vmatprep.mubr.bf16.mxu0 %v263
    %947 = vmatmul.mubr.bf16.gmra.mrb[0].mxu0 %v256
    %v948 = vpop.f32.mrb[0].mxu0
    %v949 = vadd.f32 %v909, %v948
    %v950 = vpop.f32.mrb[0].mxu0
    %v951 = vpop.f32.mrb[0].mxu0
    %v952 = vpop.f32.mrb[0].mxu0
    %953 = vdwg.mxu0
    %v954 = vsub.f32 0.0, %v949
    %v955 = vmul.f32 %v954, 1.442695
    %v956 = vpow.pop %v955
    %v957 = vadd.f32 %v956, 1.0
    %v958 = vrcp.pop %v957
    %v959 = vmul.f32 1.0, %v958
    %v960 = vpack.c.bf16 %v959, %v959
    %v961 = vld [vmem:[%s3] sm:$0xf]
    %v962 = vld [vmem:[%s3 + $0x4] sm:$0xf]
    %v963 = vld [vmem:[%s3 + $0x8] sm:$0xf]
    %v964 = vld [vmem:[%s3 + $0xc] sm:$0xf]
    %v965 = vld [vmem:[%s3 + $0x10] sm:$0xf]
    %v966 = vld [vmem:[%s3 + $0x14] sm:$0xf]
    %v967 = vld [vmem:[%s3 + $0x18] sm:$0xf]
    %v968 = vld [vmem:[%s3 + $0x1c] sm:$0xf]
    %v969 = vld [vmem:[%s4] sm:$0x1]
    %v971 = vlaneseq
    %v972 = vshrl.u32 %v971, 7
    %v973 = vsub.s32 0, %v972
    %v974 = vrot.slane %v969, %v973
    %v984 = vunpack.c.l.b16 %v961
    %v985 = vunpack.c.l.b16 %v962
    %v986 = vunpack.c.l.b16 %v963
    %v987 = vunpack.c.l.b16 %v964
    %v988 = vunpack.c.l.b16 %v965
    %v989 = vunpack.c.l.b16 %v966
    %v990 = vunpack.c.l.b16 %v967
    %v991 = vunpack.c.l.b16 %v968
    %v992 = vpack.c.b16 %v985, %v984
    %v993 = vpack.c.b16 %v987, %v986
    %v994 = vpack.c.b16 %v989, %v988
    %v995 = vpack.c.b16 %v991, %v990
    %vm1000 = vcmask 523264
    %v1002 = vsel %vm1000, %v960, 0
    %1004 = vmatprep.subr.bf16.mxu0 0
    %1005 = vmatpush1.bf16.msra.mxu0 %v992
    %1006 = vmatprep.subr.bf16.mxu0 0
    %1007 = vmatpush1.bf16.msra.mxu0 %v993
    %1008 = vmatprep.subr.bf16.mxu0 0
    %1009 = vmatpush1.bf16.msra.mxu0 %v994
    %1010 = vmatprep.subr.bf16.mxu0 0
    %1011 = vmatpush1.bf16.msra.mxu0 %v995
    %1012 = vmatprep.subr.bf16.mxu0 0
    %1013 = vmatpush1.bf16.msra.mxu0 0
    %1014 = vmatprep.subr.bf16.mxu0 0
    %1015 = vmatpush1.bf16.msra.mxu0 0
    %1016 = vmatprep.subr.bf16.mxu0 0
    %1017 = vmatpush1.bf16.msra.mxu0 0
    %1018 = vmatprep.subr.bf16.mxu0 0
    %1019 = vmatpush1.bf16.msra.mxu0 0
    %1020 = vmatprep.subr.bf16.mxu0 0
    %1021 = vmatpush1.bf16.msra.mxu0 0
    %1022 = vmatprep.subr.bf16.mxu0 0
    %1023 = vmatpush1.bf16.msra.mxu0 0
    %1024 = vmatprep.subr.bf16.mxu0 0
    %1025 = vmatpush1.bf16.msra.mxu0 0
    %1026 = vmatprep.subr.bf16.mxu0 0
    %1027 = vmatpush1.bf16.msra.mxu0 0
    %1028 = vmatprep.subr.bf16.mxu0 0
    %1029 = vmatpush1.bf16.msra.mxu0 0
    %1030 = vmatprep.subr.bf16.mxu0 0
    %1031 = vmatpush1.bf16.msra.mxu0 0
    %1032 = vmatprep.subr.bf16.mxu0 0
    %1033 = vmatpush1.bf16.msra.mxu0 0
    %1034 = vmatprep.subr.bf16.mxu0 0
    %1035 = vmatpush1.bf16.msra.mxu0 0
    %1036 = vmatprep.mubr.bf16.mxu0 0
    %1037 = vmatmul.mubr.bf16.gmra.mrb[0].mxu0 %v1002
    %v1038 = vpop.f32.mrb[0].mxu0
    %v1039 = vadd.f32 %v974, %v1038
    %v1040 = vpop.f32.mrb[0].mxu0
    %v1041 = vpop.f32.mrb[0].mxu0
    %v1042 = vpop.f32.mrb[0].mxu0
    %1043 = vdwg.mxu0
    %vm1044 = vcmask 58368
    %1045 = vst.msk [vmem:[#allocation2] sm:$0x3] %vm1044, %v1039
    // Predicated region
    $region22: #{tpu_custom_call.1} parent=1 // pred_check
      _
    $region23: #{tpu_custom_call.1} parent=1 // pred_check_branch
      %1047 = sbr.rel (0) target = $region25
    $region24: #{tpu_custom_call.1} parent=1 // pred_region
      %s1049 = ssub.s32 32, 32
      %1050 = vsyncadd [#allocation3], %s1049
      %s1052 = sshll.u32 [#allocation2], 4
      %s1053 = int_to_ptr.vmem [resolvable:$true] %s1052
      %1055 = dma.vmem_to_hbm [thread:$0]  %s1053, 32, %s5, [#allocation3]
    $region25: #{tpu_custom_call.1} parent=1 // pred_fallthru
      _
    // Predicated region
    $region26: #{tpu_custom_call.1} parent=1 // pred_check
      _
    $region27: #{tpu_custom_call.1} parent=1 // pred_check_branch
      %1057 = sbr.rel (0) target = $region29
    $region28: #{tpu_custom_call.1} parent=1 // pred_region
      %1058 = dma.done [#allocation3], 32
    $region29: #{tpu_custom_call.1} parent=1 // pred_fallthru
      _
    %1059 = vsyncpa [#allocation3], 1

</llo_original>
